<compile_context>
chip_gen: v5e
topology: v5e:2x2
jax: 0.10.0
libtpu: 0.0.40
codegen_flags: <defaults>
</compile_context>

<pallas_src>
import functools

import jax
import jax.numpy as jnp
from jax.experimental import pallas as pl
from jax.experimental.pallas import tpu as pltpu

_LANE = 128  # lane-dense last dim: full vreg / DMA width


def _dice_partial_kernel(pred_ref, tgt_ref, inter_ref, sum_ref, *,
                         rows, block_rows, needs_mask):
    p = pred_ref[...].astype(jnp.float32)
    t = tgt_ref[...].astype(jnp.float32)

    if needs_mask:
        # Last block may extend past the array; zero out the garbage rows.
        i = pl.program_id(0)
        row_ids = jax.lax.broadcasted_iota(jnp.int32, (block_rows, _LANE), 0)
        valid = (row_ids + i * block_rows) < rows
        zero = jnp.zeros((), jnp.float32)
        p = jnp.where(valid, p, zero)
        t = jnp.where(valid, t, zero)

    # (BR, 128) -> (BR//8, 8, 128) is a pure reinterpretation; summing the
    # leading axis is vreg-wise VPU adds (no cross-lane/sublane reduce here).
    p3 = p.reshape(block_rows // 8, 8, _LANE)
    t3 = t.reshape(block_rows // 8, 8, _LANE)
    inter_ref[0] = jnp.sum(p3 * t3, axis=0)
    sum_ref[0] = jnp.sum(p3 + t3, axis=0)


def dice_loss_pallas(pred, target, smooth=1.0, loss_weight=1.0,
                     block_rows=8192):
    """Pallas implementation of dice_loss (scalar output)."""
    # TODO(synk): bilinear upsample (align_corners=True) branch when pred and
    # target spatial sizes differ is not implemented; inputs must match here.
    assert pred.shape == target.shape, "pred/target spatial sizes must match"

    total = 1
    for d in pred.shape:
        total *= int(d)

    flat_p = pred.reshape(total)
    flat_t = target.reshape(total)

    pad = (-total) % _LANE
    if pad:
        # Rare for mask shapes; small zero-pad keeps the slab lane-dense and
        # zeros do not change any of the sums.
        flat_p = jnp.pad(flat_p, (0, pad))
        flat_t = jnp.pad(flat_t, (0, pad))
    rows = (total + pad) // _LANE

    p2 = flat_p.reshape(rows, _LANE)
    t2 = flat_t.reshape(rows, _LANE)

    # Block rows: multiple of 8, clamped to the (rounded-up) row count.
    br = max(8, (int(block_rows) // 8) * 8)
    rows_up = ((rows + 7) // 8) * 8
    br = min(br, rows_up)
    num_blocks = (rows + br - 1) // br
    needs_mask = (rows % br) != 0

    kernel = functools.partial(
        _dice_partial_kernel, rows=rows, block_rows=br, needs_mask=needs_mask)

    inter_part, sum_part = pl.pallas_call(
        kernel,
        out_shape=(
            jax.ShapeDtypeStruct((num_blocks, 8, _LANE), jnp.float32),
            jax.ShapeDtypeStruct((num_blocks, 8, _LANE), jnp.float32),
        ),
        grid_spec=pltpu.PrefetchScalarGridSpec(
            num_scalar_prefetch=0,
            grid=(num_blocks,),
            in_specs=[
                pl.BlockSpec((br, _LANE), lambda i: (i, 0)),
                pl.BlockSpec((br, _LANE), lambda i: (i, 0)),
            ],
            out_specs=(
                pl.BlockSpec((1, 8, _LANE), lambda i: (i, 0, 0)),
                pl.BlockSpec((1, 8, _LANE), lambda i: (i, 0, 0)),
            ),
        ),
        compiler_params=pltpu.CompilerParams(
            dimension_semantics=("parallel",)),
    )(p2, t2)

    # Tiny final reduction + dice formula (num_blocks * 8 * 128 elements).
    inter = jnp.sum(inter_part)
    denom = jnp.sum(sum_part)          # == sum(pred) + sum(target)
    dice = (2.0 * inter + smooth) / (denom + smooth)
    return loss_weight * (1.0 - dice)


class DICELossPallas:
    """Mirror of mmhuman3d DICELoss, forward backed by the Pallas kernel."""

    def __init__(self, loss_weight=1.0):
        self.loss_weight = loss_weight

    def __call__(self, pred, target, weight=None, avg_factor=None,
                 loss_weight_override=None):
        lw = (loss_weight_override
              if loss_weight_override is not None else self.loss_weight)
        return dice_loss_pallas(pred, target, smooth=1.0, loss_weight=lw)


def _reference(pred, target, smooth=1.0, loss_weight=1.0):
    inter = jnp.sum(pred * target)
    dice = (2.0 * inter + smooth) / (jnp.sum(pred) + jnp.sum(target) + smooth)
    return loss_weight * (1.0 - dice)


if __name__ == "__main__":
    key = jax.random.PRNGKey(0)

    def make_inputs(shape, k):
        k1, k2 = jax.random.split(k)
        pred = jax.nn.sigmoid(jax.random.normal(k1, shape, dtype=jnp.float32))
        target = (jax.random.uniform(k2, shape) > 0.5).astype(jnp.float32)
        return pred, target

    k1, k2, k3 = jax.random.split(key, 3)

    # Case 1: clean shape (total % 128 == 0), single large block, module API.
    pred, target = make_inputs((2, 64, 64), k1)
    loss_mod = DICELossPallas(loss_weight=1.0)
    loss = jax.block_until_ready(loss_mod(pred, target))
    ref = _reference(pred, target)
    assert jnp.allclose(loss, ref, atol=1e-5, rtol=1e-5), (loss, ref)

    # Case 2: multi-block grid with a masked (partial) tail block.
    pred, target = make_inputs((2, 20, 32), k2)
    loss = jax.block_until_ready(
        dice_loss_pallas(pred, target, loss_weight=2.0, block_rows=8))
    ref = _reference(pred, target, loss_weight=2.0)
    assert jnp.allclose(loss, ref, atol=1e-5, rtol=1e-5), (loss, ref)

    # Case 3: total not divisible by 128 (tiny zero-pad) + masked tail.
    pred, target = make_inputs((3, 33, 65), k3)
    loss = jax.block_until_ready(
        dice_loss_pallas(pred, target, block_rows=16))
    ref = _reference(pred, target)
    assert jnp.allclose(loss, ref, atol=1e-5, rtol=1e-5), (loss, ref)

    print("KERNEL_OK")
</pallas_src>

<mosaic_0001>
module attributes {stable_mosaic.version = 11 : i64} {
  func.func @_dice_partial_kernel(%arg0: i32, %arg1: memref<64x128xf32, #tpu.memory_space<vmem>>, %arg2: memref<64x128xf32, #tpu.memory_space<vmem>>, %arg3: memref<1x8x128xf32, #tpu.memory_space<vmem>>, %arg4: memref<1x8x128xf32, #tpu.memory_space<vmem>>) attributes {dimension_semantics = [#tpu.dimension_semantics<parallel>], iteration_bounds = array<i64: 1>, scalar_prefetch = 0 : i64, scratch_operands = 0 : i64, tpu.core_type = #tpu.core_type<tc>, window_params = [{transform_indices = @transform_0, window_bounds = array<i64: 64, 128>}, {transform_indices = @transform_1, window_bounds = array<i64: 64, 128>}, {transform_indices = @transform_2, window_bounds = array<i64: 1, 8, 128>}, {transform_indices = @transform_3, window_bounds = array<i64: 1, 8, 128>}]} {
    %c0 = arith.constant 0 : index
    %c0_0 = arith.constant 0 : index
    %0 = vector.load %arg1[%c0, %c0_0] : memref<64x128xf32, #tpu.memory_space<vmem>>, vector<64x128xf32>
    %c0_1 = arith.constant 0 : index
    %c0_2 = arith.constant 0 : index
    %1 = vector.load %arg2[%c0_1, %c0_2] : memref<64x128xf32, #tpu.memory_space<vmem>>, vector<64x128xf32>
    %2 = vector.shape_cast %0 : vector<64x128xf32> to vector<8x8x128xf32>
    %3 = vector.shape_cast %1 : vector<64x128xf32> to vector<8x8x128xf32>
    %4 = arith.mulf %2, %3 : vector<8x8x128xf32>
    %cst = arith.constant dense<0.000000e+00> : vector<8x128xf32>
    %5 = vector.multi_reduction <add>, %4, %cst [0] : vector<8x8x128xf32> to vector<8x128xf32>
    %c0_3 = arith.constant 0 : index
    %c0_4 = arith.constant 0 : index
    %c0_5 = arith.constant 0 : index
    %6 = vector.load %arg3[%c0_3, %c0_4, %c0_5] : memref<1x8x128xf32, #tpu.memory_space<vmem>>, vector<1x8x128xf32>
    %7 = vector.shape_cast %6 : vector<1x8x128xf32> to vector<8x128xf32>
    %8 = vector.shape_cast %5 : vector<8x128xf32> to vector<1x8x128xf32>
    tpu.vector_store %arg3[%c0_3, %c0_4, %c0_5], %8 {strides = array<i32>} : memref<1x8x128xf32, #tpu.memory_space<vmem>>, vector<1x8x128xf32>,
    %9 = arith.addf %2, %3 : vector<8x8x128xf32>
    %cst_6 = arith.constant dense<0.000000e+00> : vector<8x128xf32>
    %10 = vector.multi_reduction <add>, %9, %cst_6 [0] : vector<8x8x128xf32> to vector<8x128xf32>
    %c0_7 = arith.constant 0 : index
    %c0_8 = arith.constant 0 : index
    %c0_9 = arith.constant 0 : index
    %11 = vector.load %arg4[%c0_7, %c0_8, %c0_9] : memref<1x8x128xf32, #tpu.memory_space<vmem>>, vector<1x8x128xf32>
    %12 = vector.shape_cast %11 : vector<1x8x128xf32> to vector<8x128xf32>
    %13 = vector.shape_cast %10 : vector<8x128xf32> to vector<1x8x128xf32>
    tpu.vector_store %arg4[%c0_7, %c0_8, %c0_9], %13 {strides = array<i32>} : memref<1x8x128xf32, #tpu.memory_space<vmem>>, vector<1x8x128xf32>,
    return
  }
  func.func @transform_0(%arg0: i32) -> (i32, i32) {
    %c0_i32 = arith.constant 0 : i32
    %c0_i32_0 = arith.constant 0 : i32
    return %arg0, %c0_i32 : i32, i32
  }
  func.func @transform_1(%arg0: i32) -> (i32, i32) {
    %c0_i32 = arith.constant 0 : i32
    %c0_i32_0 = arith.constant 0 : i32
    return %arg0, %c0_i32 : i32, i32
  }
  func.func @transform_2(%arg0: i32) -> (i32, i32, i32) {
    %c0_i32 = arith.constant 0 : i32
    %c0_i32_0 = arith.constant 0 : i32
    %c0_i32_1 = arith.constant 0 : i32
    return %arg0, %c0_i32, %c0_i32_0 : i32, i32, i32
  }
  func.func @transform_3(%arg0: i32) -> (i32, i32, i32) {
    %c0_i32 = arith.constant 0 : i32
    %c0_i32_0 = arith.constant 0 : i32
    %c0_i32_1 = arith.constant 0 : i32
    return %arg0, %c0_i32, %c0_i32_0 : i32, i32, i32
  }
}

</mosaic_0001>

<llo_original>
// kernel: tpu_custom_call.1
$region0: #{tpu_custom_call.1}
  #allocation0 [shape = 'u32[]', space=smem, size = 0x4, offset = 0x4, fixed_abs, tag = 'smem constant byte address 0x4 - core index']
  #allocation1 [shape = 'u32[72,128]{1,0:T(1,128)}', space=vmem, size = 0x9000, scoped, tag = 'internal scratch']
  %s0 = inlined_call_operand.hbm [shape: f32[64,128], index: 0, kind: input, shape index: {}]
  %s1 = inlined_call_operand.hbm [shape: f32[64,128], index: 1, kind: input, shape index: {}]
  %s2 = inlined_call_operand.hbm [shape: f32[1,8,128], index: 2, kind: output, shape index: {0}]
  %s3 = inlined_call_operand.hbm [shape: f32[1,8,128], index: 3, kind: output, shape index: {1}]
  %4 = xla_tuple %s2, %s3
  %s5 = sld [smem:[#allocation0]]
  $region34: #{tpu_custom_call.1} parent=0
    _
  %s7 = ssub.s32 1, %s5
  %s8 = scalar_select 0, %s7, %s5
  $region1: #{tpu_custom_call.1} parent=0
    #allocation2 [shape = 'u8[32768]{0}', space=vmem, size = 0x8000, scoped, tag = 'input window, operand 0, single buffered']
    #allocation3 [shape = 's32[1]{0}', space=sflag, size = 0x4, scoped, tag = 'scoped memory for tpu_custom_call.1']
    #allocation4 [shape = 's32[1]{0}', space=sflag, size = 0x4, scoped, tag = 'scoped memory for tpu_custom_call.1']
    #allocation5 [shape = 'u8[32768]{0}', space=vmem, size = 0x8000, scoped, tag = 'input window, operand 1, single buffered']
    #allocation6 [shape = 's32[1]{0}', space=sflag, size = 0x4, scoped, tag = 'scoped memory for tpu_custom_call.1']
    #allocation7 [shape = 'u8[4096]{0}', space=vmem, size = 0x1000, scoped, tag = 'output window, operand 0, single buffered']
    #allocation8 [shape = 'u8[4096]{0}', space=vmem, size = 0x1000, scoped, tag = 'output window, operand 1, single buffered']
    #allocation9 [shape = 's32[1]{0}', space=sflag, size = 0x4, scoped, tag = 'scoped memory for tpu_custom_call.1']
    %9 = vsyncpa [#allocation3], 0
    %10 = vsyncpa [#allocation6], 0
    %11 = vsyncpa [#allocation4], 0
    %12 = vsyncpa [#allocation9], 0
    // Predicated region
    $region2: #{tpu_custom_call.1} parent=1 // pred_check
      _
    $region3: #{tpu_custom_call.1} parent=1 // pred_check_branch
      %14 = sbr.rel (0) target = $region5
    $region4: #{tpu_custom_call.1} parent=1 // pred_region
      %16 = vsyncadd [#allocation3], 0
      %s17 = sshll.u32 %s0, 4
      %s18 = int_to_ptr.hbm [resolvable:$true] %s17
      %s19 = sshll.u32 [#allocation2], 4
      %s20 = int_to_ptr.vmem [resolvable:$true] %s19
      %25 = dma.hbm_to_vmem [thread:$0]  %s18, 1024, %s20, [#allocation3], 128, 128, 8
    $region5: #{tpu_custom_call.1} parent=1 // pred_fallthru
      _
    // Predicated region
    $region6: #{tpu_custom_call.1} parent=1 // pred_check
      _
    $region7: #{tpu_custom_call.1} parent=1 // pred_check_branch
      %27 = sbr.rel (0) target = $region9
    $region8: #{tpu_custom_call.1} parent=1 // pred_region
      %29 = vsyncadd [#allocation6], 0
      %s30 = sshll.u32 %s1, 4
      %s31 = int_to_ptr.hbm [resolvable:$true] %s30
      %s32 = sshll.u32 [#allocation5], 4
      %s33 = int_to_ptr.vmem [resolvable:$true] %s32
      %38 = dma.hbm_to_vmem [thread:$0]  %s31, 1024, %s33, [#allocation6], 128, 128, 8
    $region9: #{tpu_custom_call.1} parent=1 // pred_fallthru
      _
    // Predicated region
    $region10: #{tpu_custom_call.1} parent=1 // pred_check
      _
    $region11: #{tpu_custom_call.1} parent=1 // pred_check_branch
      %40 = sbr.rel (0) target = $region13
    $region12: #{tpu_custom_call.1} parent=1 // pred_region
      %42 = dma.done [#allocation3], 1024
    $region13: #{tpu_custom_call.1} parent=1 // pred_fallthru
      _
    // Predicated region
    $region14: #{tpu_custom_call.1} parent=1 // pred_check
      _
    $region15: #{tpu_custom_call.1} parent=1 // pred_check_branch
      %44 = sbr.rel (0) target = $region17
    $region16: #{tpu_custom_call.1} parent=1 // pred_region
      %46 = dma.done [#allocation6], 1024
    $region17: #{tpu_custom_call.1} parent=1 // pred_fallthru
      _
    %v47 = vld [vmem:[#allocation2] sm:$0xff]
    %v48 = vld [vmem:[#allocation2 + $0x8] sm:$0xff]
    %v49 = vld [vmem:[#allocation2 + $0x10] sm:$0xff]
    %v50 = vld [vmem:[#allocation2 + $0x18] sm:$0xff]
    %v51 = vld [vmem:[#allocation2 + $0x20] sm:$0xff]
    %v52 = vld [vmem:[#allocation2 + $0x28] sm:$0xff]
    %v53 = vld [vmem:[#allocation2 + $0x30] sm:$0xff]
    %v54 = vld [vmem:[#allocation2 + $0x38] sm:$0xff]
    %v55 = vld [vmem:[#allocation5] sm:$0xff]
    %v56 = vld [vmem:[#allocation5 + $0x8] sm:$0xff]
    %v57 = vld [vmem:[#allocation5 + $0x10] sm:$0xff]
    %v58 = vld [vmem:[#allocation5 + $0x18] sm:$0xff]
    %v59 = vld [vmem:[#allocation5 + $0x20] sm:$0xff]
    %v60 = vld [vmem:[#allocation5 + $0x28] sm:$0xff]
    %v61 = vld [vmem:[#allocation5 + $0x30] sm:$0xff]
    %v62 = vld [vmem:[#allocation5 + $0x38] sm:$0xff]
    %v63 = vmul.f32 %v47, %v55
    %v64 = vmul.f32 %v48, %v56
    %v65 = vmul.f32 %v49, %v57
    %v66 = vmul.f32 %v50, %v58
    %v67 = vmul.f32 %v51, %v59
    %v68 = vmul.f32 %v52, %v60
    %v69 = vmul.f32 %v53, %v61
    %v70 = vmul.f32 %v54, %v62
    %v71 = vadd.f32 %v63, %v64
    %v72 = vadd.f32 %v71, %v65
    %v73 = vadd.f32 %v72, %v66
    %v74 = vadd.f32 %v73, %v67
    %v75 = vadd.f32 %v74, %v68
    %v76 = vadd.f32 %v75, %v69
    %v77 = vadd.f32 %v76, %v70
    %78 = vst [vmem:[#allocation7] sm:$0xff] %v77
    %v79 = vadd.f32 %v47, %v55
    %v80 = vadd.f32 %v48, %v56
    %v81 = vadd.f32 %v49, %v57
    %v82 = vadd.f32 %v50, %v58
    %v83 = vadd.f32 %v51, %v59
    %v84 = vadd.f32 %v52, %v60
    %v85 = vadd.f32 %v53, %v61
    %v86 = vadd.f32 %v54, %v62
    %v87 = vadd.f32 %v79, %v80
    %v88 = vadd.f32 %v87, %v81
    %v89 = vadd.f32 %v88, %v82
    %v90 = vadd.f32 %v89, %v83
    %v91 = vadd.f32 %v90, %v84
    %v92 = vadd.f32 %v91, %v85
    %v93 = vadd.f32 %v92, %v86
    %94 = vst [vmem:[#allocation8] sm:$0xff] %v93
    // Predicated region
    $region18: #{tpu_custom_call.1} parent=1 // pred_check
      _
    $region19: #{tpu_custom_call.1} parent=1 // pred_check_branch
      %96 = sbr.rel (0) target = $region21
    $region20: #{tpu_custom_call.1} parent=1 // pred_region
      %98 = vsyncadd [#allocation4], 0
      %s100 = sshll.u32 [#allocation7], 4
      %s101 = int_to_ptr.vmem [resolvable:$true] %s100
      %s102 = sshll.u32 %s2, 4
      %s103 = int_to_ptr.hbm [resolvable:$true] %s102
      %105 = dma.vmem_to_hbm [thread:$0]  %s101, 128, %s103, [#allocation4]
    $region21: #{tpu_custom_call.1} parent=1 // pred_fallthru
      _
    // Predicated region
    $region22: #{tpu_custom_call.1} parent=1 // pred_check
      _
    $region23: #{tpu_custom_call.1} parent=1 // pred_check_branch
      %107 = sbr.rel (0) target = $region25
    $region24: #{tpu_custom_call.1} parent=1 // pred_region
      %109 = vsyncadd [#allocation9], 0
      %s111 = sshll.u32 [#allocation8], 4
      %s112 = int_to_ptr.vmem [resolvable:$true] %s111
      %s113 = sshll.u32 %s3, 4
      %s114 = int_to_ptr.hbm [resolvable:$true] %s113
      %116 = dma.vmem_to_hbm [thread:$0]  %s112, 128, %s114, [#allocation9]
    $region25: #{tpu_custom_call.1} parent=1 // pred_fallthru
      _
    // Predicated region
    $region26: #{tpu_custom_call.1} parent=1 // pred_check
      _
    $region27: #{tpu_custom_call.1} parent=1 // pred_check_branch
      %118 = sbr.rel (0) target = $region29
    $region28: #{tpu_custom_call.1} parent=1 // pred_region
      %120 = dma.done [#allocation4], 128
    $region29: #{tpu_custom_call.1} parent=1 // pred_fallthru
      _
    // Predicated region
    $region30: #{tpu_custom_call.1} parent=1 // pred_check
      _
    $region31: #{tpu_custom_call.1} parent=1 // pred_check_branch
      %122 = sbr.rel (0) target = $region33
    $region32: #{tpu_custom_call.1} parent=1 // pred_region
      %124 = dma.done [#allocation9], 128
    $region33: #{tpu_custom_call.1} parent=1 // pred_fallthru
      _
    %125 = vsyncpa [#allocation3], 1
    %126 = vsyncpa [#allocation6], 1
    %127 = vsyncpa [#allocation4], 1
    %128 = vsyncpa [#allocation9], 1

</llo_original>
